<compile_context>
chip_gen: v5e
topology: v5e:2x2
jax: 0.10.0
libtpu: 0.0.40
codegen_flags: <defaults>
</compile_context>

<pallas_src>
import functools

import jax
import jax.numpy as jnp
from jax import lax
from jax.experimental import pallas as pl
from jax.experimental.pallas import tpu as pltpu


# --------------------------------- kernel ------------------------------------

def _contrastive_kernel(x_ref, y_ref, o_ref,
                        dots_acc, nx2_acc, ny2_acc, diag_acc,
                        *, score, inv_tau, inv_batch):
    k = pl.program_id(0)
    nk = pl.num_programs(0)

    @pl.when(k == 0)
    def _init():
        dots_acc[...] = jnp.zeros_like(dots_acc)
        nx2_acc[...] = jnp.zeros_like(nx2_acc)
        ny2_acc[...] = jnp.zeros_like(ny2_acc)
        diag_acc[...] = jnp.zeros_like(diag_acc)

    # Pairwise dots on the MXU in the input dtype, f32 accumulation.
    x = x_ref[...]                                            # (B, tk)
    y = y_ref[...]                                            # (B, tk)
    dots_acc[...] += lax.dot_general(x, y, (((1,), (1,)), ((), ())),
                                     preferred_element_type=jnp.float32)

    xf = x.astype(jnp.float32)
    yf = y.astype(jnp.float32)
    ones_row = jnp.ones((1, xf.shape[-1]), jnp.float32)       # shared ones vector
    # Route the O(B*tk) row reductions through the MXU (idle for small B) so the
    # XLU slots stay free.
    nx2_acc[...] += lax.dot_general(xf * xf, ones_row, (((1,), (1,)), ((), ())),
                                    preferred_element_type=jnp.float32)   # (B,1)
    ny2_acc[...] += lax.dot_general(ones_row, yf * yf, (((1,), (1,)), ((), ())),
                                    preferred_element_type=jnp.float32)   # (1,B)
    if score == 'euclidean':
        d = xf - yf
        diag_acc[...] += lax.dot_general(d * d, ones_row, (((1,), (1,)), ((), ())),
                                         preferred_element_type=jnp.float32)  # exact ||x_i-y_i||^2

    @pl.when(k == nk - 1)
    def _finish():
        B = dots_acc.shape[0]
        nx2 = nx2_acc[...]                                    # (B,1)
        ny2 = ny2_acc[...]                                    # (1,B)
        row_ids = lax.broadcasted_iota(jnp.int32, (B, B), 0)
        col_ids = lax.broadcasted_iota(jnp.int32, (B, B), 1)
        is_diag = row_ids == col_ids

        if score == 'dualentropy':
            eps = 1e-12                                       # F.normalize eps
            inv_nx = 1.0 / jnp.maximum(jnp.sqrt(nx2), eps)    # (B,1)
            inv_ny = 1.0 / jnp.maximum(jnp.sqrt(ny2), eps)    # (1,B)
            # Rescale the accumulator in place: no second (B,B) logits buffer.
            dots_acc[...] = dots_acc[...] * (inv_nx * inv_tau) * inv_ny
            logits = dots_acc[...]
            diag = jnp.sum(jnp.where(is_diag, logits, 0.0), axis=1, keepdims=True)
            sum_diag = jnp.sum(diag, axis=0, keepdims=True)   # (1,1)

            # loss1 = CE(X@Y^T/tau): row-wise (lane-direction) logsumexp.
            m1 = jnp.max(logits, axis=1, keepdims=True)
            lse1 = m1 + jnp.log(jnp.sum(jnp.exp(logits - m1), axis=1, keepdims=True))
            sum1 = jnp.sum(lse1, axis=0, keepdims=True)

            # loss2 = CE(Y@X^T/tau): column (sublane-direction) logsumexp of the SAME
            # matrix — no transposed copy materialized.
            m2 = jnp.max(logits, axis=0, keepdims=True)
            lse2 = m2 + jnp.log(jnp.sum(jnp.exp(logits - m2), axis=0, keepdims=True))
            sum2 = jnp.sum(lse2, axis=1, keepdims=True)

            o_ref[...] = (0.5 * sum1 + 0.5 * sum2 - sum_diag) * inv_batch
        else:
            if score == 'cosinesimilarity':
                eps = 1e-8                                    # clamp of ||a||*||b||
                nx = jnp.sqrt(nx2)                            # (B,1)
                ny = jnp.sqrt(ny2)                            # (1,B)
                inv_nx = 1.0 / jnp.maximum(nx, 1e-19)
                inv_ny = 1.0 / jnp.maximum(ny, 1e-19)
                # PyTorch nn.CosineSimilarity clamps the *product* of the norms; do it
                # with O(B) divides + a (B,B) select instead of B^2 EUP divides.
                inv_den = jnp.where(nx * ny > eps, inv_nx * inv_ny, 1.0 / eps)
                s_all = dots_acc[...] * inv_den * inv_tau     # (B,B) = scores[:,1:]/tau
                s0 = jnp.sum(jnp.where(is_diag, s_all, 0.0),
                             axis=1, keepdims=True)           # scores[:,0]/tau
            else:  # euclidean
                dg = diag_acc[...]                            # exact ||x_i-y_i||^2
                d2 = jnp.maximum(nx2 + ny2 - 2.0 * dots_acc[...], 0.0)
                d2 = jnp.where(is_diag, dg, d2)               # exact diagonal everywhere
                s_all = -jnp.sqrt(d2) * inv_tau
                s0 = -jnp.sqrt(dg) * inv_tau

            # loss = mean_i( logsumexp([s0_i, s_all_i,:]) - s0_i )
            m = jnp.maximum(jnp.max(s_all, axis=1, keepdims=True), s0)
            lse = m + jnp.log(jnp.exp(s0 - m) +
                              jnp.sum(jnp.exp(s_all - m), axis=1, keepdims=True))
            o_ref[...] = jnp.sum(lse - s0, axis=0, keepdims=True) * inv_batch


# --------------------------------- wrapper -----------------------------------

def _vmem_capacity_bytes():
    try:
        cap = int(pltpu.get_tpu_info().vmem_capacity_bytes)
        if cap > 0:
            return cap
    except Exception:
        pass
    return 64 * 1024 * 1024    # conservative fallback (v7x per-core VMEM)


def _plan_tiles(B, D, in_bytes, max_tk=None):
    """Pick (padded_D, tk).  Largest K tile whose pipelined input footprint plus the
    f32 (B,B) accumulator / epilogue temporaries fits the VMEM budget."""
    cap = _vmem_capacity_bytes()
    fixed = 4 * B * B * 4 + (1 << 20)            # (B,B) acc + epilogue temps + slack
    budget = max(2 << 20, int(cap * 0.6) - fixed)
    per_col = 4 * B * in_bytes                   # 2 inputs x 2 pipeline buffers
    tk = min(D, max(1, budget // per_col))
    if max_tk is not None:
        tk = min(tk, int(max_tk))
    if tk >= D:
        return D, D, cap                         # single full-D block, no padding
    tk = max(128, (tk // 128) * 128)             # lane-aligned K tiles
    d_pad = ((D + tk - 1) // tk) * tk            # zero-pad D to a tile multiple
    return d_pad, tk, cap


def _call_loss_kernel(view1, view2, *, score, tau, max_tk=None):
    view1 = jnp.asarray(view1)
    view2 = jnp.asarray(view2)
    B, D = view1.shape
    in_bytes = view1.dtype.itemsize
    d_pad, tk, cap = _plan_tiles(B, D, in_bytes, max_tk)
    if d_pad != D:
        # Zero columns contribute nothing to dots / norms / diffs for every score.
        pad = ((0, 0), (0, d_pad - D))
        view1 = jnp.pad(view1, pad)
        view2 = jnp.pad(view2, pad)
    n_steps = d_pad // tk

    kernel = functools.partial(_contrastive_kernel, score=score,
                               inv_tau=1.0 / float(tau), inv_batch=1.0 / float(B))

    need = 4 * B * tk * in_bytes + 4 * B * B * 4 + (4 << 20)
    vmem_limit = int(min(cap, max(32 << 20, need)))

    trans = 2 * B * B + 2 * B if score == 'dualentropy' else B * B + 4 * B
    cost = pl.CostEstimate(flops=2 * B * B * d_pad + 6 * B * d_pad,
                           transcendentals=trans,
                           bytes_accessed=2 * B * d_pad * in_bytes + 4)

    out = pl.pallas_call(
        kernel,
        out_shape=jax.ShapeDtypeStruct((1, 1), jnp.float32),
        grid_spec=pltpu.PrefetchScalarGridSpec(
            num_scalar_prefetch=0,
            grid=(n_steps,),
            in_specs=[pl.BlockSpec((B, tk), lambda k: (0, k)),
                      pl.BlockSpec((B, tk), lambda k: (0, k))],
            out_specs=pl.BlockSpec((1, 1), lambda k: (0, 0)),
            scratch_shapes=[pltpu.VMEM((B, B), jnp.float32),    # pairwise dots acc
                            pltpu.VMEM((B, 1), jnp.float32),    # |x_i|^2
                            pltpu.VMEM((1, B), jnp.float32),    # |y_j|^2 (row)
                            pltpu.VMEM((B, 1), jnp.float32)]),  # exact ||x_i-y_i||^2
        compiler_params=pltpu.CompilerParams(
            dimension_semantics=("arbitrary",),
            vmem_limit_bytes=vmem_limit),
        cost_estimate=cost,
    )(view1, view2)
    return out[0, 0]


class ContrastiveLoss:
    """JAX/Pallas port of the PyTorch ContrastiveLoss module (forward only)."""

    def __init__(self, **kwargs):
        self.score_func = kwargs['score_function']
        self.tau = float(kwargs['temperature_scalar'])
        if self.score_func not in ('dualentropy', 'cosinesimilarity',
                                   'euclidean', 'none'):
            raise ValueError('Invalid Score Function for Contrastive Learning')

    def __call__(self, view1, view2, stoic=None):
        # torch code returns FloatTensor([0.0]) for non-tensor inputs / 'none'
        if view1 is None or view2 is None or self.score_func == 'none':
            return jnp.zeros((1,), jnp.float32)
        return _call_loss_kernel(view1, view2, score=self.score_func, tau=self.tau)


# ------------------------------ pure-JAX reference ---------------------------

def _ref_dualentropy(v1, v2, tau):
    xn = v1 / jnp.maximum(jnp.linalg.norm(v1, axis=-1, keepdims=True), 1e-12)
    yn = v2 / jnp.maximum(jnp.linalg.norm(v2, axis=-1, keepdims=True), 1e-12)
    B = v1.shape[0]
    lab = jnp.arange(B)

    def ce(lg):
        return jnp.mean(jax.nn.logsumexp(lg, axis=1) - lg[lab, lab])

    return 0.5 * ce(xn @ yn.T / tau) + 0.5 * ce(yn @ xn.T / tau)


def _ref_pairwise_scores(v1, v2, kind):
    B, D = v1.shape
    neg = jnp.broadcast_to(v2[None], (B, B, D))
    anchor = jnp.broadcast_to(v1[:, None], (B, B + 1, D))
    target = jnp.concatenate([v2[:, None], neg], axis=1)
    if kind == 'cos':
        num = jnp.sum(anchor * target, axis=2)
        den = jnp.maximum(jnp.linalg.norm(anchor, axis=2) *
                          jnp.linalg.norm(target, axis=2), 1e-8)
        return num / den
    return -jnp.sqrt(jnp.sum(jnp.abs(anchor - target) ** 2, axis=2))


def _ref_cosine(v1, v2, tau):
    s = -jax.nn.log_softmax(_ref_pairwise_scores(v1, v2, 'cos') / tau, axis=1)
    return jnp.mean(s[:, 0])


def _ref_euclidean(v1, v2, tau):
    s = -jax.nn.log_softmax(_ref_pairwise_scores(v1, v2, 'euc') / tau, axis=1)
    return jnp.mean(s[:, 0])


# ----------------------------------- main ------------------------------------

if __name__ == "__main__":
    key = jax.random.PRNGKey(0)
    tau = 0.5
    checks = [('dualentropy', _ref_dualentropy),
              ('cosinesimilarity', _ref_cosine),
              ('euclidean', _ref_euclidean)]

    # (8, 32): single full-D block.  (8, 416) with max_tk=128: exercises the K-tiled
    # grid plus zero-padding of a non-128-aligned D.
    for (B, D, max_tk) in [(8, 32, None), (8, 416, 128)]:
        k1, k2 = jax.random.split(jax.random.fold_in(key, D))
        view1 = jax.random.normal(k1, (B, D), jnp.float32)
        view2 = jax.random.normal(k2, (B, D), jnp.float32)
        for name, ref_fn in checks:
            if max_tk is None:
                mod = ContrastiveLoss(score_function=name, temperature_scalar=tau,
                                      rank=0)
                loss = mod(view1, view2, None)
            else:
                loss = _call_loss_kernel(view1, view2, score=name, tau=tau,
                                         max_tk=max_tk)
            jax.block_until_ready(loss)
            ref = float(ref_fn(view1, view2, tau))
            assert abs(float(loss) - ref) < 2e-3 * max(1.0, abs(ref)), \
                (name, B, D, max_tk, float(loss), ref)

    # 'none' / missing-view paths (no kernel; returns zeros like the torch code)
    none_mod = ContrastiveLoss(score_function='none', temperature_scalar=tau, rank=0)
    jax.block_until_ready(none_mod(view1, view2, None))
    jax.block_until_ready(ContrastiveLoss(
        score_function='dualentropy', temperature_scalar=tau, rank=0)(None, view2, None))

    print("KERNEL_OK")
</pallas_src>

<mosaic_0001>
module attributes {stable_mosaic.version = 11 : i64} {
  func.func @_contrastive_kernel(%arg0: i32, %arg1: memref<8x32xf32, #tpu.memory_space<vmem>>, %arg2: memref<8x32xf32, #tpu.memory_space<vmem>>, %arg3: memref<1x1xf32, #tpu.memory_space<vmem>>, %arg4: memref<8x8xf32, #tpu.memory_space<vmem>>, %arg5: memref<8x1xf32, #tpu.memory_space<vmem>>, %arg6: memref<1x8xf32, #tpu.memory_space<vmem>>, %arg7: memref<8x1xf32, #tpu.memory_space<vmem>>) attributes {dimension_semantics = [#tpu.dimension_semantics<arbitrary>], iteration_bounds = array<i64: 1>, scalar_prefetch = 0 : i64, scratch_operands = 4 : i64, tpu.core_type = #tpu.core_type<tc>, window_params = [{transform_indices = @transform_0, window_bounds = array<i64: 8, 32>}, {transform_indices = @transform_1, window_bounds = array<i64: 8, 32>}, {pipeline_mode = #tpu.pipeline_mode<synchronous>, transform_indices = @transform_2, window_bounds = array<i64: 1, 1>}]} {
    %c0_i32 = arith.constant 0 : i32
    %0 = arith.cmpi eq, %arg0, %c0_i32 : i32
    %1 = arith.extui %0 : i1 to i32
    %c0_i32_0 = arith.constant 0 : i32
    %2 = arith.cmpi ne, %1, %c0_i32_0 : i32
    scf.if %2 {
      %cst_21 = arith.constant 0.000000e+00 : f32
      %23 = vector.broadcast %cst_21 : f32 to vector<8x8xf32>
      %c0_22 = arith.constant 0 : index
      %c0_23 = arith.constant 0 : index
      %24 = vector.load %arg4[%c0_22, %c0_23] : memref<8x8xf32, #tpu.memory_space<vmem>>, vector<8x8xf32>
      tpu.vector_store %arg4[%c0_22, %c0_23], %23 {strides = array<i32>} : memref<8x8xf32, #tpu.memory_space<vmem>>, vector<8x8xf32>,
      %cst_24 = arith.constant 0.000000e+00 : f32
      %25 = vector.broadcast %cst_24 : f32 to vector<8x1xf32>
      %c0_25 = arith.constant 0 : index
      %c0_26 = arith.constant 0 : index
      %26 = vector.load %arg5[%c0_25, %c0_26] : memref<8x1xf32, #tpu.memory_space<vmem>>, vector<8x1xf32>
      tpu.vector_store %arg5[%c0_25, %c0_26], %25 {strides = array<i32>} : memref<8x1xf32, #tpu.memory_space<vmem>>, vector<8x1xf32>,
      %cst_27 = arith.constant 0.000000e+00 : f32
      %27 = vector.broadcast %cst_27 : f32 to vector<1x8xf32>
      %c0_28 = arith.constant 0 : index
      %c0_29 = arith.constant 0 : index
      %28 = vector.load %arg6[%c0_28, %c0_29] : memref<1x8xf32, #tpu.memory_space<vmem>>, vector<1x8xf32>
      tpu.vector_store %arg6[%c0_28, %c0_29], %27 {strides = array<i32>} : memref<1x8xf32, #tpu.memory_space<vmem>>, vector<1x8xf32>,
      %cst_30 = arith.constant 0.000000e+00 : f32
      %29 = vector.broadcast %cst_30 : f32 to vector<8x1xf32>
      %c0_31 = arith.constant 0 : index
      %c0_32 = arith.constant 0 : index
      %30 = vector.load %arg7[%c0_31, %c0_32] : memref<8x1xf32, #tpu.memory_space<vmem>>, vector<8x1xf32>
      tpu.vector_store %arg7[%c0_31, %c0_32], %29 {strides = array<i32>} : memref<8x1xf32, #tpu.memory_space<vmem>>, vector<8x1xf32>,
    } else {
    }
    %c0 = arith.constant 0 : index
    %c0_1 = arith.constant 0 : index
    %3 = vector.load %arg1[%c0, %c0_1] : memref<8x32xf32, #tpu.memory_space<vmem>>, vector<8x32xf32>
    %c0_2 = arith.constant 0 : index
    %c0_3 = arith.constant 0 : index
    %4 = vector.load %arg2[%c0_2, %c0_3] : memref<8x32xf32, #tpu.memory_space<vmem>>, vector<8x32xf32>
    %c0_4 = arith.constant 0 : index
    %c0_5 = arith.constant 0 : index
    %5 = vector.load %arg4[%c0_4, %c0_5] : memref<8x8xf32, #tpu.memory_space<vmem>>, vector<8x8xf32>
    %cst = arith.constant dense<0.000000e+00> : vector<8x8xf32>
    %6 = tpu.matmul %3, %4, %cst {dimension_numbers = #tpu.dot_dimension_numbers<[1], [1], [0], [0], [0, 0, 1, 0], [], []>} : vector<8x32xf32>, vector<8x32xf32>, vector<8x8xf32> -> vector<8x8xf32>
    %7 = arith.addf %5, %6 : vector<8x8xf32>
    %c0_6 = arith.constant 0 : index
    %c0_7 = arith.constant 0 : index
    %8 = vector.load %arg4[%c0_6, %c0_7] : memref<8x8xf32, #tpu.memory_space<vmem>>, vector<8x8xf32>
    tpu.vector_store %arg4[%c0_6, %c0_7], %7 {strides = array<i32>} : memref<8x8xf32, #tpu.memory_space<vmem>>, vector<8x8xf32>,
    %cst_8 = arith.constant 1.000000e+00 : f32
    %9 = vector.broadcast %cst_8 : f32 to vector<1x32xf32>
    %c0_9 = arith.constant 0 : index
    %c0_10 = arith.constant 0 : index
    %10 = vector.load %arg5[%c0_9, %c0_10] : memref<8x1xf32, #tpu.memory_space<vmem>>, vector<8x1xf32>
    %11 = arith.mulf %3, %3 : vector<8x32xf32>
    %cst_11 = arith.constant dense<0.000000e+00> : vector<8x1xf32>
    %12 = tpu.matmul %11, %9, %cst_11 {dimension_numbers = #tpu.dot_dimension_numbers<[1], [1], [0], [0], [0, 0, 1, 0], [], []>} : vector<8x32xf32>, vector<1x32xf32>, vector<8x1xf32> -> vector<8x1xf32>
    %13 = arith.addf %10, %12 : vector<8x1xf32>
    %c0_12 = arith.constant 0 : index
    %c0_13 = arith.constant 0 : index
    %14 = vector.load %arg5[%c0_12, %c0_13] : memref<8x1xf32, #tpu.memory_space<vmem>>, vector<8x1xf32>
    tpu.vector_store %arg5[%c0_12, %c0_13], %13 {strides = array<i32>} : memref<8x1xf32, #tpu.memory_space<vmem>>, vector<8x1xf32>,
    %c0_14 = arith.constant 0 : index
    %c0_15 = arith.constant 0 : index
    %15 = vector.load %arg6[%c0_14, %c0_15] : memref<1x8xf32, #tpu.memory_space<vmem>>, vector<1x8xf32>
    %16 = arith.mulf %4, %4 : vector<8x32xf32>
    %cst_16 = arith.constant dense<0.000000e+00> : vector<1x8xf32>
    %17 = tpu.matmul %9, %16, %cst_16 {dimension_numbers = #tpu.dot_dimension_numbers<[1], [1], [0], [0], [0, 0, 1, 0], [], []>} : vector<1x32xf32>, vector<8x32xf32>, vector<1x8xf32> -> vector<1x8xf32>
    %18 = arith.addf %15, %17 : vector<1x8xf32>
    %c0_17 = arith.constant 0 : index
    %c0_18 = arith.constant 0 : index
    %19 = vector.load %arg6[%c0_17, %c0_18] : memref<1x8xf32, #tpu.memory_space<vmem>>, vector<1x8xf32>
    tpu.vector_store %arg6[%c0_17, %c0_18], %18 {strides = array<i32>} : memref<1x8xf32, #tpu.memory_space<vmem>>, vector<1x8xf32>,
    %c0_i32_19 = arith.constant 0 : i32
    %20 = arith.cmpi eq, %arg0, %c0_i32_19 : i32
    %21 = arith.extui %20 : i1 to i32
    %c0_i32_20 = arith.constant 0 : i32
    %22 = arith.cmpi ne, %21, %c0_i32_20 : i32
    scf.if %22 {
      %c0_21 = arith.constant 0 : index
      %c0_22 = arith.constant 0 : index
      %23 = vector.load %arg5[%c0_21, %c0_22] : memref<8x1xf32, #tpu.memory_space<vmem>>, vector<8x1xf32>
      %c0_23 = arith.constant 0 : index
      %c0_24 = arith.constant 0 : index
      %24 = vector.load %arg6[%c0_23, %c0_24] : memref<1x8xf32, #tpu.memory_space<vmem>>, vector<1x8xf32>
      %25 = tpu.iota {dimensions = array<i32: 0>} : vector<8x8xi32>
      %26 = tpu.iota {dimensions = array<i32: 1>} : vector<8x8xi32>
      %27 = arith.cmpi eq, %25, %26 : vector<8x8xi32>
      %28 = math.sqrt %23 : vector<8x1xf32>
      %cst_25 = arith.constant 9.99999996E-13 : f32
      %29 = vector.broadcast %cst_25 : f32 to vector<8x1xf32>
      %30 = arith.maximumf %28, %29 : vector<8x1xf32>
      %cst_26 = arith.constant 1.000000e+00 : f32
      %31 = vector.broadcast %cst_26 : f32 to vector<8x1xf32>
      %32 = arith.divf %31, %30 : vector<8x1xf32>
      %33 = math.sqrt %24 : vector<1x8xf32>
      %cst_27 = arith.constant 9.99999996E-13 : f32
      %34 = vector.broadcast %cst_27 : f32 to vector<1x8xf32>
      %35 = arith.maximumf %33, %34 : vector<1x8xf32>
      %cst_28 = arith.constant 1.000000e+00 : f32
      %36 = vector.broadcast %cst_28 : f32 to vector<1x8xf32>
      %37 = arith.divf %36, %35 : vector<1x8xf32>
      %c0_29 = arith.constant 0 : index
      %c0_30 = arith.constant 0 : index
      %38 = vector.load %arg4[%c0_29, %c0_30] : memref<8x8xf32, #tpu.memory_space<vmem>>, vector<8x8xf32>
      %cst_31 = arith.constant 2.000000e+00 : f32
      %39 = vector.broadcast %cst_31 : f32 to vector<8x1xf32>
      %40 = arith.mulf %32, %39 : vector<8x1xf32>
      %41 = vector.broadcast %40 : vector<8x1xf32> to vector<8x8xf32>
      %42 = arith.mulf %38, %41 : vector<8x8xf32>
      %43 = vector.broadcast %37 : vector<1x8xf32> to vector<8x8xf32>
      %44 = arith.mulf %42, %43 : vector<8x8xf32>
      %c0_32 = arith.constant 0 : index
      %c0_33 = arith.constant 0 : index
      %45 = vector.load %arg4[%c0_32, %c0_33] : memref<8x8xf32, #tpu.memory_space<vmem>>, vector<8x8xf32>
      tpu.vector_store %arg4[%c0_32, %c0_33], %44 {strides = array<i32>} : memref<8x8xf32, #tpu.memory_space<vmem>>, vector<8x8xf32>,
      %c0_34 = arith.constant 0 : index
      %c0_35 = arith.constant 0 : index
      %46 = vector.load %arg4[%c0_34, %c0_35] : memref<8x8xf32, #tpu.memory_space<vmem>>, vector<8x8xf32>
      %cst_36 = arith.constant 0.000000e+00 : f32
      %47 = vector.broadcast %cst_36 : f32 to vector<8x8xf32>
      %48 = arith.select %27, %46, %47 : vector<8x8xi1>, vector<8x8xf32>
      %cst_37 = arith.constant dense<0.000000e+00> : vector<8xf32>
      %49 = vector.multi_reduction <add>, %48, %cst_37 [1] : vector<8x8xf32> to vector<8xf32>
      %50 = vector.shape_cast %49 : vector<8xf32> to vector<8x1xf32>
      %cst_38 = arith.constant dense<0.000000e+00> : vector<1xf32>
      %51 = vector.multi_reduction <add>, %50, %cst_38 [0] : vector<8x1xf32> to vector<1xf32>
      %52 = vector.shape_cast %51 : vector<1xf32> to vector<1x1xf32>
      %cst_39 = arith.constant dense<0xFF800000> : vector<8xf32>
      %53 = vector.multi_reduction <maximumf>, %46, %cst_39 [1] : vector<8x8xf32> to vector<8xf32>
      %54 = vector.shape_cast %53 : vector<8xf32> to vector<8x1xf32>
      %55 = vector.broadcast %54 : vector<8x1xf32> to vector<8x8xf32>
      %56 = arith.subf %46, %55 : vector<8x8xf32>
      %57 = math.exp %56 : vector<8x8xf32>
      %cst_40 = arith.constant dense<0.000000e+00> : vector<8xf32>
      %58 = vector.multi_reduction <add>, %57, %cst_40 [1] : vector<8x8xf32> to vector<8xf32>
      %59 = vector.shape_cast %58 : vector<8xf32> to vector<8x1xf32>
      %60 = math.log %59 : vector<8x1xf32>
      %61 = arith.addf %54, %60 : vector<8x1xf32>
      %cst_41 = arith.constant dense<0.000000e+00> : vector<1xf32>
      %62 = vector.multi_reduction <add>, %61, %cst_41 [0] : vector<8x1xf32> to vector<1xf32>
      %63 = vector.shape_cast %62 : vector<1xf32> to vector<1x1xf32>
      %cst_42 = arith.constant dense<0xFF800000> : vector<8xf32>
      %64 = vector.multi_reduction <maximumf>, %46, %cst_42 [0] : vector<8x8xf32> to vector<8xf32>
      %65 = vector.shape_cast %64 : vector<8xf32> to vector<1x8xf32>
      %66 = vector.broadcast %65 : vector<1x8xf32> to vector<8x8xf32>
      %67 = arith.subf %46, %66 : vector<8x8xf32>
      %68 = math.exp %67 : vector<8x8xf32>
      %cst_43 = arith.constant dense<0.000000e+00> : vector<8xf32>
      %69 = vector.multi_reduction <add>, %68, %cst_43 [0] : vector<8x8xf32> to vector<8xf32>
      %70 = vector.shape_cast %69 : vector<8xf32> to vector<1x8xf32>
      %71 = math.log %70 : vector<1x8xf32>
      %72 = arith.addf %65, %71 : vector<1x8xf32>
      %cst_44 = arith.constant dense<0.000000e+00> : vector<1xf32>
      %73 = vector.multi_reduction <add>, %72, %cst_44 [1] : vector<1x8xf32> to vector<1xf32>
      %74 = vector.shape_cast %73 : vector<1xf32> to vector<1x1xf32>
      %cst_45 = arith.constant 5.000000e-01 : f32
      %75 = vector.broadcast %cst_45 : f32 to vector<1x1xf32>
      %76 = arith.mulf %75, %63 : vector<1x1xf32>
      %cst_46 = arith.constant 5.000000e-01 : f32
      %77 = vector.broadcast %cst_46 : f32 to vector<1x1xf32>
      %78 = arith.mulf %77, %74 : vector<1x1xf32>
      %79 = arith.addf %76, %78 : vector<1x1xf32>
      %80 = arith.subf %79, %52 : vector<1x1xf32>
      %cst_47 = arith.constant 1.250000e-01 : f32
      %81 = vector.broadcast %cst_47 : f32 to vector<1x1xf32>
      %82 = arith.mulf %80, %81 : vector<1x1xf32>
      %c0_48 = arith.constant 0 : index
      %c0_49 = arith.constant 0 : index
      %83 = vector.load %arg3[%c0_48, %c0_49] : memref<1x1xf32, #tpu.memory_space<vmem>>, vector<1x1xf32>
      tpu.vector_store %arg3[%c0_48, %c0_49], %82 {strides = array<i32>} : memref<1x1xf32, #tpu.memory_space<vmem>>, vector<1x1xf32>,
    } else {
    }
    return
  }
  func.func @transform_0(%arg0: i32) -> (i32, i32) {
    %c0_i32 = arith.constant 0 : i32
    %c0_i32_0 = arith.constant 0 : i32
    return %c0_i32, %arg0 : i32, i32
  }
  func.func @transform_1(%arg0: i32) -> (i32, i32) {
    %c0_i32 = arith.constant 0 : i32
    %c0_i32_0 = arith.constant 0 : i32
    return %c0_i32, %arg0 : i32, i32
  }
  func.func @transform_2(%arg0: i32) -> (i32, i32) {
    %c0_i32 = arith.constant 0 : i32
    %c0_i32_0 = arith.constant 0 : i32
    %c0_i32_1 = arith.constant 0 : i32
    return %c0_i32, %c0_i32_0 : i32, i32
  }
}

</mosaic_0001>

<llo_original>
// kernel: tpu_custom_call.1
$region0: #{tpu_custom_call.1}
  #allocation0 [shape = 'u32[]', space=smem, size = 0x4, offset = 0x4, fixed_abs, tag = 'smem constant byte address 0x4 - core index']
  #allocation1 [shape = 'u32[72,128]{1,0:T(1,128)}', space=vmem, size = 0x9000, scoped, tag = 'internal scratch']
  #allocation2 [shape = 'f32[8,8]{1,0:T(8,128)}', space=vmem, size = 0x1000, scoped, tag = 'scratch operand']
  #allocation3 [shape = 'f32[8,1]{1,0:T(8,128)}', space=vmem, size = 0x1000, scoped, tag = 'scratch operand']
  #allocation4 [shape = 'f32[1,8]{1,0:T(1,128)}', space=vmem, size = 0x200, scoped, tag = 'scratch operand']
  #allocation5 [shape = 'f32[8,1]{1,0:T(8,128)}', space=vmem, size = 0x1000, scoped, tag = 'scratch operand']
  %s0 = inlined_call_operand.hbm [shape: f32[8,32], index: 0, kind: input, shape index: {}]
  %s1 = inlined_call_operand.hbm [shape: f32[8,32], index: 1, kind: input, shape index: {}]
  %s2 = inlined_call_operand.hbm [shape: f32[1,1], index: 2, kind: output, shape index: {}]
  %s3 = sld [smem:[#allocation0]]
  $region34: #{tpu_custom_call.1} parent=0
    _
  %s5 = ssub.s32 1, %s3
  %s6 = scalar_select 0, %s5, %s3
  $region1: #{tpu_custom_call.1} parent=0
    #allocation6 [shape = 'u8[4096]{0}', space=vmem, size = 0x1000, scoped, tag = 'input window, operand 0, single buffered']
    #allocation7 [shape = 's32[1]{0}', space=sflag, size = 0x4, scoped, tag = 'scoped memory for tpu_custom_call.1']
    #allocation8 [shape = 's32[1]{0}', space=sflag, size = 0x4, scoped, tag = 'scoped memory for tpu_custom_call.1']
    #allocation9 [shape = 'u8[4096]{0}', space=vmem, size = 0x1000, scoped, tag = 'input window, operand 1, single buffered']
    #allocation10 [shape = 's32[1]{0}', space=sflag, size = 0x4, scoped, tag = 'scoped memory for tpu_custom_call.1']
    #allocation11 [shape = 'u8[512]{0}', space=vmem, size = 0x400, scoped, tag = 'output window, operand 0, single buffered']
    %7 = vsyncpa [#allocation7], 0
    %8 = vsyncpa [#allocation10], 0
    %9 = vsyncpa [#allocation8], 0
    // Predicated region
    $region2: #{tpu_custom_call.1} parent=1 // pred_check
      _
    $region3: #{tpu_custom_call.1} parent=1 // pred_check_branch
      %11 = sbr.rel (0) target = $region5
    $region4: #{tpu_custom_call.1} parent=1 // pred_region
      %13 = vsyncadd [#allocation7], 0
      %s15 = sshll.u32 %s0, 4
      %s16 = int_to_ptr.hbm [resolvable:$true] %s15
      %s17 = sshll.u32 [#allocation6], 4
      %s18 = int_to_ptr.vmem [resolvable:$true] %s17
      %20 = dma.hbm_to_vmem [thread:$0]  %s16, 128, %s18, [#allocation7]
    $region5: #{tpu_custom_call.1} parent=1 // pred_fallthru
      _
    // Predicated region
    $region6: #{tpu_custom_call.1} parent=1 // pred_check
      _
    $region7: #{tpu_custom_call.1} parent=1 // pred_check_branch
      %22 = sbr.rel (0) target = $region9
    $region8: #{tpu_custom_call.1} parent=1 // pred_region
      %24 = vsyncadd [#allocation10], 0
      %s26 = sshll.u32 %s1, 4
      %s27 = int_to_ptr.hbm [resolvable:$true] %s26
      %s28 = sshll.u32 [#allocation9], 4
      %s29 = int_to_ptr.vmem [resolvable:$true] %s28
      %31 = dma.hbm_to_vmem [thread:$0]  %s27, 128, %s29, [#allocation10]
    $region9: #{tpu_custom_call.1} parent=1 // pred_fallthru
      _
    // Predicated region
    $region10: #{tpu_custom_call.1} parent=1 // pred_check
      _
    $region11: #{tpu_custom_call.1} parent=1 // pred_check_branch
      %33 = sbr.rel (0) target = $region13
    $region12: #{tpu_custom_call.1} parent=1 // pred_region
      %35 = dma.done [#allocation7], 128
    $region13: #{tpu_custom_call.1} parent=1 // pred_fallthru
      _
    // Predicated region
    $region14: #{tpu_custom_call.1} parent=1 // pred_check
      _
    $region15: #{tpu_custom_call.1} parent=1 // pred_check_branch
      %37 = sbr.rel (0) target = $region17
    $region16: #{tpu_custom_call.1} parent=1 // pred_region
      %39 = dma.done [#allocation10], 128
    $region17: #{tpu_custom_call.1} parent=1 // pred_fallthru
      _
    %p40 = scmp.eq.s32.totalorder 0, 0
    // Predicated region
    $region18: #{tpu_custom_call.1} parent=1 // pred_check
      %p41 = pneg %p40
    $region19: #{tpu_custom_call.1} parent=1 // pred_check_branch
      %43 = sbr.rel (%p41) target = $region21
    $region20: #{tpu_custom_call.1} parent=1 // pred_region
      %vm44 = vcmask 64512
      %45 = vst.msk [vmem:[#allocation2] sm:$0xff] %vm44, 0.0
      %vm46 = vcmask 7168
      %47 = vst.msk [vmem:[#allocation3] sm:$0xff] %vm46, 0.0
      %vm48 = vcmask 57344
      %49 = vst.msk [vmem:[#allocation4] sm:$0x1] %vm48, 0.0
      %50 = vst.msk [vmem:[#allocation5] sm:$0xff] %vm46, 0.0
    $region21: #{tpu_custom_call.1} parent=1 // pred_fallthru
      _
    %v51 = vld [vmem:[#allocation6] sm:$0xff]
    %v52 = vld [vmem:[#allocation9] sm:$0xff]
    %v53 = vld [vmem:[#allocation2] sm:$0xff]
    %vm54 = vcmask 261120
    %v56 = vsel %vm54, %v51, 0
    %v59 = vsel %vm54, %v52, 0
    %61 = vmatpush.xpose.msra.mxu0 0.0
    %62 = vmatpush.xpose.msra.mxu0 0.0
    %63 = vmatpush.xpose.msra.mxu0 0.0
    %64 = vmatpush.xpose.msra.mxu0 0.0
    %65 = vmatpush.xpose.msra.mxu0 0.0
    %66 = vmatpush.xpose.msra.mxu0 0.0
    %67 = vmatpush.xpose.msra.mxu0 0.0
    %68 = vmatpush.xpose.msra.mxu0 0.0
    %69 = vmatpush.xpose.msra.mxu0 0.0
    %70 = vmatpush.xpose.msra.mxu0 0.0
    %71 = vmatpush.xpose.msra.mxu0 0.0
    %72 = vmatpush.xpose.msra.mxu0 0.0
    %73 = vmatpush.xpose.msra.mxu0 0.0
    %74 = vmatpush.xpose.msra.mxu0 0.0
    %75 = vmatpush.xpose.msra.mxu0 0.0
    %76 = vmatpush.xpose.msra.mxu0 %v59
    %77 = vmatmul.f32.gmra.mxu0 %v56
    %v78 = vpop.f32.mrf.mxu0
    %v79 = vadd.f32 0.0, %v78
    %80 = vdwg.mxu0
    %v81 = vadd.f32 %v53, %v79
    %vm82 = vcmask 64512
    %83 = vst.msk [vmem:[#allocation2] sm:$0xff] %vm82, %v81
    %v84 = vld [vmem:[#allocation3] sm:$0xff]
    %v85 = vmul.f32 %v51, %v51
    %v86 = vsel %vm54, %v85, 0.0
    %87 = vadd.xlane.f32.xlu0 %v86
    %v88 = vpop.xlane.xlu0 %87
    %v89 = vadd.f32 %v84, %v88
    %vm90 = vcmask 7168
    %91 = vst.msk [vmem:[#allocation3] sm:$0xff] %vm90, %v89
    %v92 = vld [vmem:[#allocation4] sm:$0x1]
    %v93 = vmul.f32 %v52, %v52
    %v95 = vsel %vm54, 1.0, 0
    %v98 = vsel %vm54, %v93, 0
    %100 = vmatpush.xpose.msra.mxu0 0.0
    %101 = vmatpush.xpose.msra.mxu0 0.0
    %102 = vmatpush.xpose.msra.mxu0 0.0
    %103 = vmatpush.xpose.msra.mxu0 0.0
    %104 = vmatpush.xpose.msra.mxu0 0.0
    %105 = vmatpush.xpose.msra.mxu0 0.0
    %106 = vmatpush.xpose.msra.mxu0 0.0
    %107 = vmatpush.xpose.msra.mxu0 0.0
    %108 = vmatpush.xpose.msra.mxu0 0.0
    %109 = vmatpush.xpose.msra.mxu0 0.0
    %110 = vmatpush.xpose.msra.mxu0 0.0
    %111 = vmatpush.xpose.msra.mxu0 0.0
    %112 = vmatpush.xpose.msra.mxu0 0.0
    %113 = vmatpush.xpose.msra.mxu0 0.0
    %114 = vmatpush.xpose.msra.mxu0 0.0
    %115 = vmatpush.xpose.msra.mxu0 %v98
    %116 = vmatmul.f32.gmra.mxu0 %v95
    %v117 = vpop.f32.mrf.mxu0
    %v118 = vadd.f32 0.0, %v117
    %119 = vdwg.mxu0
    %v120 = vadd.f32 %v92, %v118
    %vm121 = vcmask 57344
    %122 = vst.msk [vmem:[#allocation4] sm:$0x1] %vm121, %v120
    // Predicated region
    $region22: #{tpu_custom_call.1} parent=1 // pred_check
      %p123 = pneg %p40
    $region23: #{tpu_custom_call.1} parent=1 // pred_check_branch
      %125 = sbr.rel (%p123) target = $region25
    $region24: #{tpu_custom_call.1} parent=1 // pred_region
      %v126 = vld [vmem:[#allocation3] sm:$0xff]
      %v127 = vld [vmem:[#allocation4] sm:$0x1]
      %v128 = vlaneseq
      %v129 = vshrl.u32 %v128, 7
      %v130 = vlaneseq
      %v131 = vand.u32 %v130, 127
      %vm132 = vcmp.eq.s32.totalorder %v129, %v131
      %v133 = vrsqrt.pop %v126
      %v134 = vmul.f32 %v133, %v126
      %v135 = vmul.f32 %v134, %v133
      %v136 = vmul.f32 0.5, %v135
      %v137 = vsub.f32 1.5, %v136
      %v138 = vmul.f32 %v133, %v137
      %v139 = vmul.f32 %v126, %v138
      %vm140 = vcmp.eq.f32.partialorder %v126, inf
      %v141 = vsel %vm140, %v126, %v139
      %vm142 = vcmp.eq.f32.partialorder %v126, 0.0
      %v143 = vand.u32 %v126, 2147483648
      %v144 = vsel %vm142, %v143, %v141
      %v145 = vmax.f32 %v144, 1e-12
      %v146 = vrcp.pop %v145
      %v147 = vmul.f32 %v145, %v146
      %v148 = vsub.f32 1.0, %v147
      %v149 = vmul.f32 %v146, %v148
      %v150 = vadd.f32 %v146, %v149
      %vm151 = vweird.f32 %v145
      %vm152 = vweird.f32 %v146
      %vm153 = vmor %vm151, %vm152
      %v154 = vsel %vm153, %v146, %v150
      %v155 = vand.u32 2147483647, %v145
      %vm156 = vcmp.eq.f32.partialorder %v155, 8.507059e+37
      %v157 = vand.u32 %v145, 2147483648
      %v158 = vor.u32 1.1754944e-38, %v157
      %v159 = vsel %vm156, %v158, %v154
      %v160 = vmul.f32 1.0, %v159
      %v161 = vrsqrt.pop %v127
      %v162 = vmul.f32 %v161, %v127
      %v163 = vmul.f32 %v162, %v161
      %v164 = vmul.f32 0.5, %v163
      %v165 = vsub.f32 1.5, %v164
      %v166 = vmul.f32 %v161, %v165
      %v167 = vmul.f32 %v127, %v166
      %vm168 = vcmp.eq.f32.partialorder %v127, inf
      %v169 = vsel %vm168, %v127, %v167
      %vm170 = vcmp.eq.f32.partialorder %v127, 0.0
      %v171 = vand.u32 %v127, 2147483648
      %v172 = vsel %vm170, %v171, %v169
      %v173 = vmax.f32 %v172, 1e-12
      %v174 = vrcp.pop %v173
      %v175 = vmul.f32 %v173, %v174
      %v176 = vsub.f32 1.0, %v175
      %v177 = vmul.f32 %v174, %v176
      %v178 = vadd.f32 %v174, %v177
      %vm179 = vweird.f32 %v173
      %vm180 = vweird.f32 %v174
      %vm181 = vmor %vm179, %vm180
      %v182 = vsel %vm181, %v174, %v178
      %v183 = vand.u32 2147483647, %v173
      %vm184 = vcmp.eq.f32.partialorder %v183, 8.507059e+37
      %v185 = vand.u32 %v173, 2147483648
      %v186 = vor.u32 1.1754944e-38, %v185
      %v187 = vsel %vm184, %v186, %v182
      %v188 = vmul.f32 1.0, %v187
      %v189 = vld [vmem:[#allocation2] sm:$0xff]
      %v190 = vmul.f32 %v160, 2.0
      %192 = vset.pattern.permute.xlu0 0
      %193 = vperm.xlu0 %192, %v190
      %v194 = vpop.permute.xlu0 %193
      %v196 = vmul.f32 %v189, %v194
      %v198 = vperm.slane %v188, 0
      %v200 = vmul.f32 %v196, %v198
      %201 = vst.msk [vmem:[#allocation2] sm:$0xff] %vm82, %v200
      %v202 = vld [vmem:[#allocation2] sm:$0xff]
      %v203 = vsel %vm132, %v202, 0.0
      %v204 = vsel %vm82, %v203, 0.0
      %205 = vadd.xlane.f32.xlu0 %v204
      %v206 = vpop.xlane.xlu0 %205
      %v207 = vrot.slane %v206, 4
      %v208 = vadd.f32 %v206, %v207
      %v209 = vrot.slane %v208, 2
      %v210 = vadd.f32 %v208, %v209
      %v211 = vrot.slane %v210, 1
      %v212 = vadd.f32 %v210, %v211
      %v213 = vsel %vm82, %v202, -inf
      %214 = vmax.xlane.f32.xlu0 %v213
      %v215 = vpop.xlane.xlu0 %214
      %v216 = vsub.f32 %v202, %v215
      %v217 = vmul.f32 %v216, 1.442695
      %v218 = vpow.pop %v217
      %v219 = vsel %vm82, %v218, 0.0
      %220 = vadd.xlane.f32.xlu0 %v219
      %v221 = vpop.xlane.xlu0 %220
      %v222 = vlog2.pop %v221
      %v223 = vmul.f32 %v222, 0.6931472
      %v224 = vadd.f32 %v215, %v223
      %v225 = vrot.slane %v224, 4
      %v226 = vadd.f32 %v224, %v225
      %v227 = vrot.slane %v226, 2
      %v228 = vadd.f32 %v226, %v227
      %v229 = vrot.slane %v228, 1
      %v230 = vadd.f32 %v228, %v229
      %v231 = vrot.slane %v213, 4
      %v232 = vmax.f32 %v213, %v231
      %v233 = vrot.slane %v232, 2
      %v234 = vmax.f32 %v232, %v233
      %v235 = vrot.slane %v234, 1
      %v236 = vmax.f32 %v234, %v235
      %v237 = vsub.f32 %v202, %v236
      %v238 = vmul.f32 %v237, 1.442695
      %v239 = vpow.pop %v238
      %v240 = vsel %vm82, %v239, 0.0
      %v241 = vrot.slane %v240, 4
      %v242 = vadd.f32 %v240, %v241
      %v243 = vrot.slane %v242, 2
      %v244 = vadd.f32 %v242, %v243
      %v245 = vrot.slane %v244, 1
      %v246 = vadd.f32 %v244, %v245
      %v247 = vlog2.pop %v246
      %v248 = vmul.f32 %v247, 0.6931472
      %v249 = vadd.f32 %v236, %v248
      %v250 = vsel %vm82, %v249, 0.0
      %251 = vadd.xlane.f32.xlu0 %v250
      %v252 = vpop.xlane.xlu0 %251
      %v253 = vmul.f32 %v230, 0.5
      %v254 = vmul.f32 %v252, 0.5
      %v255 = vadd.f32 %v253, %v254
      %v256 = vsub.f32 %v255, %v212
      %v257 = vmul.f32 %v256, 0.125
      %vm258 = vcmask 0
      %259 = vst.msk [vmem:[#allocation11] sm:$0x1] %vm258, %v257
    $region25: #{tpu_custom_call.1} parent=1 // pred_fallthru
      _
    // Predicated region
    $region26: #{tpu_custom_call.1} parent=1 // pred_check
      _
    $region27: #{tpu_custom_call.1} parent=1 // pred_check_branch
      %261 = sbr.rel (0) target = $region29
    $region28: #{tpu_custom_call.1} parent=1 // pred_region
      %263 = vsyncadd [#allocation8], 0
      %s265 = sshll.u32 [#allocation11], 4
      %s266 = int_to_ptr.vmem [resolvable:$true] %s265
      %s267 = sshll.u32 %s2, 4
      %s268 = int_to_ptr.hbm [resolvable:$true] %s267
      %270 = dma.vmem_to_hbm [thread:$0]  %s266, 16, %s268, [#allocation8]
    $region29: #{tpu_custom_call.1} parent=1 // pred_fallthru
      _
    // Predicated region
    $region30: #{tpu_custom_call.1} parent=1 // pred_check
      _
    $region31: #{tpu_custom_call.1} parent=1 // pred_check_branch
      %272 = sbr.rel (0) target = $region33
    $region32: #{tpu_custom_call.1} parent=1 // pred_region
      %274 = dma.done [#allocation8], 16
    $region33: #{tpu_custom_call.1} parent=1 // pred_fallthru
      _
    %275 = vsyncpa [#allocation7], 1
    %276 = vsyncpa [#allocation10], 1
    %277 = vsyncpa [#allocation8], 1

</llo_original>
